<compile_context>
chip_gen: v7x
topology: tpu7x:2x2x1
jax: 0.10.0
libtpu: 0.0.40
codegen_flags: <defaults>
</compile_context>

<pallas_src>
import functools
from enum import Enum

import jax
import jax.numpy as jnp
from jax.experimental import pallas as pl
from jax.experimental.pallas import tpu as pltpu


# ----------------------------- Pallas kernel -------------------------------

def _round_up(x, m):
    return (x + m - 1) // m * m


def _pad2(a, rows, cols):
    r, c = a.shape
    if (r, c) == (rows, cols):
        return a
    return jnp.pad(a, ((0, rows - r), (0, cols - c)))


def _matmul_tanh_epi_kernel(*refs, epilogue, n_epi):
    """acc += x @ w over the K grid axis; on the last K step apply
    bias + tanh + (optional) fused elementwise epilogue and store."""
    x_ref, w_ref, b_ref = refs[0], refs[1], refs[2]
    epi_refs = refs[3:3 + n_epi]
    o_ref = refs[3 + n_epi]
    acc_ref = refs[4 + n_epi]

    @pl.when(pl.program_id(2) == 0)
    def _():
        acc_ref[...] = jnp.zeros_like(acc_ref)

    acc_ref[...] += jnp.dot(
        x_ref[...], w_ref[...], preferred_element_type=jnp.float32
    )

    @pl.when(pl.program_id(2) == pl.num_programs(2) - 1)
    def _():
        y = jnp.tanh(acc_ref[...] + b_ref[...].astype(jnp.float32))
        if epilogue is not None:
            y = epilogue(y, *(r[...].astype(jnp.float32) for r in epi_refs))
        o_ref[...] = y.astype(o_ref.dtype)


def matmul_tanh_epilogue(x, w, b, epilogue=None, epilogue_args=(),
                         *, tm_max=256, tn_max=256, tk_max=512):
    """out = epilogue(tanh(x @ w + b), *epilogue_args)   (single pallas_call)

    x: [M, K], w: [K, N], b: [1, N] (or [N]), each epilogue arg: [M, N].
    Shapes that don't divide the tiles are zero-padded and sliced back.
    """
    M, K = x.shape
    K2, N = w.shape
    assert K == K2, (x.shape, w.shape)
    b = b.reshape(1, -1)
    assert b.shape[1] == N

    # Tile selection: single full-extent block for small dims, MXU-sized
    # (<=256x256, K<=512) tiles otherwise so the (K,N) weight is never forced
    # to be fully VMEM-resident (scales to large H on v5e/v6e/v7x).
    tm = tm_max if M > tm_max else _round_up(M, 8)
    tn = tn_max if N > tn_max else N
    tk = tk_max if K > tk_max else K
    m_pad = _round_up(M, tm)
    n_pad = _round_up(N, tn)
    k_pad = _round_up(K, tk)

    xp = _pad2(x, m_pad, k_pad)
    wp = _pad2(w, k_pad, n_pad)
    bp = _pad2(b, 1, n_pad)
    epi_p = []
    for e in epilogue_args:
        assert e.shape == (M, N), e.shape
        epi_p.append(_pad2(e, m_pad, n_pad))
    epi_p = tuple(epi_p)

    grid = (m_pad // tm, n_pad // tn, k_pad // tk)

    in_specs = [
        pl.BlockSpec((tm, tk), lambda i, j, k: (i, k)),   # x tile
        pl.BlockSpec((tk, tn), lambda i, j, k: (k, j)),   # w tile
        pl.BlockSpec((1, tn), lambda i, j, k: (0, j)),    # bias tile
    ] + [pl.BlockSpec((tm, tn), lambda i, j, k: (i, j)) for _ in epi_p]

    kernel = functools.partial(
        _matmul_tanh_epi_kernel, epilogue=epilogue, n_epi=len(epi_p)
    )

    out = pl.pallas_call(
        kernel,
        out_shape=jax.ShapeDtypeStruct((m_pad, n_pad), x.dtype),
        grid=grid,
        in_specs=in_specs,
        out_specs=pl.BlockSpec((tm, tn), lambda i, j, k: (i, j)),
        scratch_shapes=[pltpu.VMEM((tm, tn), jnp.float32)],
        compiler_params=pltpu.CompilerParams(
            # M/N shard across TensorCores (v7x megacore); K is the reduction.
            dimension_semantics=("parallel", "parallel", "arbitrary"),
            # Tiles above stay well under the default scoped-VMEM limit even
            # with double-buffering; raise vmem_limit_bytes here if tiles grow.
        ),
    )(xp, wp, bp, *epi_p)

    if (m_pad, n_pad) != (M, N):
        out = out[:M, :N]
    return out


# ------------------------ Function-set op wrappers -------------------------

class EWSum:
    """Elementwise sum — plain jnp; fused by XLA under jit (no Pallas launch)."""

    def __call__(self, a, b):
        return a + b


class EWProd:
    """Elementwise product — plain jnp; fused by XLA under jit."""

    def __call__(self, a, b):
        return a * b


class LinearTanh:
    """o = tanh(x @ w + b) on [B, S, H] via the Pallas matmul kernel."""

    def __init__(self, dim, key):
        k1, k2 = jax.random.split(key)
        self.w = jax.random.normal(k1, (dim, dim), jnp.float32) / jnp.sqrt(dim)
        self.b = jax.random.normal(k2, (1, dim), jnp.float32) * 0.01

    def __call__(self, x):
        B, S, H = x.shape
        y = matmul_tanh_epilogue(x.reshape(B * S, H), self.w, self.b)
        return y.reshape(B, S, H)

    def call_fused(self, x, epilogue, *epilogue_args):
        """Same linear+tanh, but with an extra fused elementwise epilogue so a
        whole (linear -> elementwise tree) expression is one pallas_call."""
        B, S, H = x.shape
        flat_args = tuple(e.reshape(B * S, H) for e in epilogue_args)
        y = matmul_tanh_epilogue(
            x.reshape(B * S, H), self.w, self.b,
            epilogue=epilogue, epilogue_args=flat_args,
        )
        return y.reshape(B, S, H)


class FunctionSet:
    """Deterministic synthetic function set (parameters derived from one key)."""

    def __init__(self, key):
        self._key = key

    def element_wise_sum(self, dim):
        return EWSum()

    def element_wise_product(self, dim):
        return EWProd()

    def linear(self, dim):
        self._key, sub = jax.random.split(self._key)
        return LinearTanh(dim, sub)


# --------------------------- ModuleNode (JAX) ------------------------------

class GeneType(Enum):
    FUNCTION = 0
    TERMINAL = 1
    ADF = 2
    ADF_TERMINAL = 3


class Node:
    def __init__(self, value, node_type):
        self.value = value
        self.node_type = node_type


class ModuleNode:
    """Mirrors the PyTorch ModuleNode forward semantics exactly."""

    def __init__(self, node, function_set):
        self.node = node
        self.function_set = function_set
        self.node_module = None
        self.child_list = []

    def __str__(self):
        return str(self.node.value)

    def init_node_module(self, dim):
        if self.node.node_type in (
            GeneType.TERMINAL,
            GeneType.ADF_TERMINAL,
            GeneType.ADF,
        ):
            return
        self.node_module = getattr(self.function_set, self.node.value)(dim)

    def init_child_list(self, child_list):
        self.child_list = list(child_list)

    def assign_adf(self, adf_dict):
        self.node_module = adf_dict[self.node.value]

    def forward(self, input_dict):
        if self.node.node_type in (GeneType.TERMINAL, GeneType.ADF_TERMINAL):
            return input_dict[self.node.value]
        elif self.node.node_type == GeneType.ADF:
            for i, child in enumerate(self.child_list):
                # torch: v.detach().clone(); jnp arrays are immutable, so a
                # dict copy reproduces the isolation semantics.
                copy_input_dict = dict(input_dict)
                input_dict[f"t{i + 1}"] = child(copy_input_dict)
            return self.node_module(input_dict)
        return self.node_module(*[child(input_dict) for child in self.child_list])

    __call__ = forward


# --------------------------------- main ------------------------------------

if __name__ == "__main__":
    B, S, H = 2, 8, 32  # batch, seq, hidden

    key = jax.random.PRNGKey(0)
    fs_key, kx1, kx2 = jax.random.split(key, 3)

    fset = FunctionSet(fs_key)

    # ADF definition tree:  a1(t1, t2) := element_wise_product(t1, t2)
    adf_root = ModuleNode(Node("element_wise_product", GeneType.FUNCTION), fset)
    adf_root.init_node_module(H)
    adf_root.init_child_list(
        [
            ModuleNode(Node("t1", GeneType.ADF_TERMINAL), fset),
            ModuleNode(Node("t2", GeneType.ADF_TERMINAL), fset),
        ]
    )
    adf_dict = {"a1": adf_root}

    # Main tree: element_wise_sum( a1( linear(x1), x2 ), x2 )
    lin_node = ModuleNode(Node("linear", GeneType.FUNCTION), fset)
    lin_node.init_node_module(H)
    lin_node.init_child_list([ModuleNode(Node("x1", GeneType.TERMINAL), fset)])

    adf_call = ModuleNode(Node("a1", GeneType.ADF), fset)
    adf_call.assign_adf(adf_dict)
    adf_call.init_child_list(
        [lin_node, ModuleNode(Node("x2", GeneType.TERMINAL), fset)]
    )

    root = ModuleNode(Node("element_wise_sum", GeneType.FUNCTION), fset)
    root.init_node_module(H)
    root.init_child_list([adf_call, ModuleNode(Node("x2", GeneType.TERMINAL), fset)])

    # Deterministic inputs.
    x1 = jax.random.normal(kx1, (B, S, H), jnp.float32)
    x2 = jax.random.normal(kx2, (B, S, H), jnp.float32)

    # (a) Generic ModuleNode forward, jitted: one Pallas matmul kernel + XLA-
    #     fused elementwise ops, dispatched as a single compiled program.
    @jax.jit
    def tree_forward(a, c):
        return root({"x1": a, "x2": c})

    # (b) Fully fused compilation of this specific tree: the elementwise
    #     subtree above the linear node runs as the matmul kernel's epilogue,
    #     so the whole expression tanh(x1@w+b) * x2 + x2 is ONE pallas_call.
    @jax.jit
    def fused_tree_forward(a, c):
        return lin_node.node_module.call_fused(
            a, lambda y, e: y * e + e, c
        )

    out_tree = jax.block_until_ready(tree_forward(x1, x2))
    out_fused = jax.block_until_ready(fused_tree_forward(x1, x2))

    # Pure-jnp reference of the same tree.
    w, b = lin_node.node_module.w, lin_node.node_module.b
    lin_ref = jnp.tanh(x1.reshape(-1, H) @ w + b).reshape(B, S, H)
    ref = lin_ref * x2 + x2

    assert out_fused.shape == (B, S, H) and out_fused.dtype == jnp.float32
    assert jnp.allclose(out_fused, ref, atol=1e-5, rtol=1e-5)
    assert jnp.allclose(out_tree, ref, atol=1e-5, rtol=1e-5)

    print("KERNEL_OK")
</pallas_src>

<mosaic_0001>
module attributes {stable_mosaic.version = 11 : i64} {
  func.func @_matmul_tanh_epi_kernel(%arg0: i32, %arg1: i32, %arg2: i32, %arg3: memref<16x32xf32, #tpu.memory_space<vmem>>, %arg4: memref<32x32xf32, #tpu.memory_space<vmem>>, %arg5: memref<1x32xf32, #tpu.memory_space<vmem>>, %arg6: memref<16x32xf32, #tpu.memory_space<vmem>>, %arg7: memref<16x32xf32, #tpu.memory_space<vmem>>) attributes {dimension_semantics = [#tpu.dimension_semantics<parallel>, #tpu.dimension_semantics<parallel>, #tpu.dimension_semantics<arbitrary>], iteration_bounds = array<i64: 1, 1, 1>, scalar_prefetch = 0 : i64, scratch_operands = 1 : i64, tpu.core_type = #tpu.core_type<tc>, window_params = [{transform_indices = @transform_0, window_bounds = array<i64: 16, 32>}, {transform_indices = @transform_1, window_bounds = array<i64: 32, 32>}, {transform_indices = @transform_2, window_bounds = array<i64: 1, 32>}, {transform_indices = @transform_3, window_bounds = array<i64: 16, 32>}]} {
    %c0_i32 = arith.constant 0 : i32
    %0 = arith.cmpi eq, %arg2, %c0_i32 : i32
    %1 = arith.extui %0 : i1 to i32
    %c0_i32_0 = arith.constant 0 : i32
    %2 = arith.cmpi ne, %1, %c0_i32_0 : i32
    scf.if %2 {
      %cst_10 = arith.constant 0.000000e+00 : f32
      %12 = vector.broadcast %cst_10 : f32 to vector<16x32xf32>
      %c0_11 = arith.constant 0 : index
      %c0_12 = arith.constant 0 : index
      %13 = vector.load %arg7[%c0_11, %c0_12] : memref<16x32xf32, #tpu.memory_space<vmem>>, vector<16x32xf32>
      tpu.vector_store %arg7[%c0_11, %c0_12], %12 {strides = array<i32>} : memref<16x32xf32, #tpu.memory_space<vmem>>, vector<16x32xf32>,
    } else {
    }
    %c0 = arith.constant 0 : index
    %c0_1 = arith.constant 0 : index
    %3 = vector.load %arg7[%c0, %c0_1] : memref<16x32xf32, #tpu.memory_space<vmem>>, vector<16x32xf32>
    %c0_2 = arith.constant 0 : index
    %c0_3 = arith.constant 0 : index
    %4 = vector.load %arg3[%c0_2, %c0_3] : memref<16x32xf32, #tpu.memory_space<vmem>>, vector<16x32xf32>
    %c0_4 = arith.constant 0 : index
    %c0_5 = arith.constant 0 : index
    %5 = vector.load %arg4[%c0_4, %c0_5] : memref<32x32xf32, #tpu.memory_space<vmem>>, vector<32x32xf32>
    %cst = arith.constant dense<0.000000e+00> : vector<16x32xf32>
    %6 = tpu.matmul %4, %5, %cst {dimension_numbers = #tpu.dot_dimension_numbers<[1], [0], [0], [1], [0, 0, 1, 1], [], []>} : vector<16x32xf32>, vector<32x32xf32>, vector<16x32xf32> -> vector<16x32xf32>
    %7 = arith.addf %3, %6 : vector<16x32xf32>
    %c0_6 = arith.constant 0 : index
    %c0_7 = arith.constant 0 : index
    %8 = vector.load %arg7[%c0_6, %c0_7] : memref<16x32xf32, #tpu.memory_space<vmem>>, vector<16x32xf32>
    tpu.vector_store %arg7[%c0_6, %c0_7], %7 {strides = array<i32>} : memref<16x32xf32, #tpu.memory_space<vmem>>, vector<16x32xf32>,
    %c0_i32_8 = arith.constant 0 : i32
    %9 = arith.cmpi eq, %arg2, %c0_i32_8 : i32
    %10 = arith.extui %9 : i1 to i32
    %c0_i32_9 = arith.constant 0 : i32
    %11 = arith.cmpi ne, %10, %c0_i32_9 : i32
    scf.if %11 {
      %c0_10 = arith.constant 0 : index
      %c0_11 = arith.constant 0 : index
      %12 = vector.load %arg7[%c0_10, %c0_11] : memref<16x32xf32, #tpu.memory_space<vmem>>, vector<16x32xf32>
      %c0_12 = arith.constant 0 : index
      %c0_13 = arith.constant 0 : index
      %13 = vector.load %arg5[%c0_12, %c0_13] : memref<1x32xf32, #tpu.memory_space<vmem>>, vector<1x32xf32>
      %14 = vector.broadcast %13 : vector<1x32xf32> to vector<16x32xf32>
      %15 = arith.addf %12, %14 : vector<16x32xf32>
      %16 = math.tanh %15 : vector<16x32xf32>
      %c0_14 = arith.constant 0 : index
      %c0_15 = arith.constant 0 : index
      %17 = vector.load %arg6[%c0_14, %c0_15] : memref<16x32xf32, #tpu.memory_space<vmem>>, vector<16x32xf32>
      tpu.vector_store %arg6[%c0_14, %c0_15], %16 {strides = array<i32>} : memref<16x32xf32, #tpu.memory_space<vmem>>, vector<16x32xf32>,
    } else {
    }
    return
  }
  func.func @transform_0(%arg0: i32, %arg1: i32, %arg2: i32) -> (i32, i32) {
    %c0_i32 = arith.constant 0 : i32
    return %arg0, %arg2 : i32, i32
  }
  func.func @transform_1(%arg0: i32, %arg1: i32, %arg2: i32) -> (i32, i32) {
    %c0_i32 = arith.constant 0 : i32
    return %arg2, %arg1 : i32, i32
  }
  func.func @transform_2(%arg0: i32, %arg1: i32, %arg2: i32) -> (i32, i32) {
    %c0_i32 = arith.constant 0 : i32
    %c0_i32_0 = arith.constant 0 : i32
    return %c0_i32, %arg1 : i32, i32
  }
  func.func @transform_3(%arg0: i32, %arg1: i32, %arg2: i32) -> (i32, i32) {
    %c0_i32 = arith.constant 0 : i32
    return %arg0, %arg1 : i32, i32
  }
}

</mosaic_0001>

<llo_original>
// kernel: tree_forward.1
$region0: #{tree_forward.1}
  #allocation0 [shape = 'u32[]', space=smem, size = 0x4, offset = 0x4, fixed_abs, tag = 'smem constant byte address 0x4 - core index']
  #allocation1 [shape = 'u32[144,128]{1,0:T(1,128)}', space=vmem, size = 0x12000, scoped, tag = 'internal scratch']
  #allocation2 [shape = 'f32[16,32]{1,0:T(8,128)}', space=vmem, size = 0x2000, scoped, tag = 'scratch operand']
  %s0 = inlined_call_operand.hbm [shape: f32[16,32], index: 0, kind: input, shape index: {}]
  %s1 = inlined_call_operand.hbm [shape: f32[32,32], index: 1, kind: input, shape index: {}]
  %s2 = inlined_call_operand.vmem [shape: f32[1,32], index: 2, kind: input, shape index: {}]
  %s3 = inlined_call_operand.vmem [shape: f32[16,32], index: 3, kind: output, shape index: {}]
  %s4 = sld [smem:[#allocation0]]
  $region38: #{tree_forward.1} parent=0
    _
  %s6 = ssub.s32 1, %s4
  %s7 = scalar_select 0, %s6, %s4
  $region1: #{tree_forward.1} parent=0
    #allocation3 [shape = 'u8[8192]{0}', space=vmem, size = 0x2000, scoped, tag = 'input window, operand 0, single buffered']
    #allocation4 [shape = 's32[1]{0}', space=sflag, size = 0x4, scoped, tag = 'scoped memory for tree_forward.1']
    #allocation5 [shape = 'u8[16384]{0}', space=vmem, size = 0x4000, scoped, tag = 'input window, operand 1, single buffered']
    #allocation6 [shape = 's32[1]{0}', space=sflag, size = 0x4, scoped, tag = 'scoped memory for tree_forward.1']
    %8 = vsyncpa [#allocation4], 0
    %9 = vsyncpa [#allocation6], 0
    // Predicated region
    $region2: #{tree_forward.1} parent=1 // pred_check
      _
    $region3: #{tree_forward.1} parent=1 // pred_check_branch
      %11 = sbr.rel (0) target = $region5
    $region4: #{tree_forward.1} parent=1 // pred_region
      %s13 = ssub.s32 256, 256
      %14 = vsyncadd [#allocation4], %s13
      %s15 = sshll.u32 [#allocation3], 4
      %s16 = int_to_ptr.vmem [resolvable:$true] %s15
      %21 = dma.hbm_to_vmem [thread:$0]  %s0, 256, %s16, [#allocation4], 128, 128, 8
    $region5: #{tree_forward.1} parent=1 // pred_fallthru
      _
    // Predicated region
    $region6: #{tree_forward.1} parent=1 // pred_check
      _
    $region7: #{tree_forward.1} parent=1 // pred_check_branch
      %23 = sbr.rel (0) target = $region9
    $region8: #{tree_forward.1} parent=1 // pred_region
      %s25 = ssub.s32 512, 512
      %26 = vsyncadd [#allocation6], %s25
      %s27 = sshll.u32 [#allocation5], 4
      %s28 = int_to_ptr.vmem [resolvable:$true] %s27
      %33 = dma.hbm_to_vmem [thread:$0]  %s1, 512, %s28, [#allocation6], 128, 128, 8
    $region9: #{tree_forward.1} parent=1 // pred_fallthru
      _
    // Predicated region
    $region10: #{tree_forward.1} parent=1 // pred_check
      _
    $region11: #{tree_forward.1} parent=1 // pred_check_branch
      %35 = sbr.rel (0) target = $region13
    $region12: #{tree_forward.1} parent=1 // pred_region
      _
    $region13: #{tree_forward.1} parent=1 // pred_fallthru
      _
    // Predicated region
    $region14: #{tree_forward.1} parent=1 // pred_check
      _
    $region15: #{tree_forward.1} parent=1 // pred_check_branch
      %37 = sbr.rel (0) target = $region17
    $region16: #{tree_forward.1} parent=1 // pred_region
      %38 = dma.done [#allocation4], 256
    $region17: #{tree_forward.1} parent=1 // pred_fallthru
      _
    // Predicated region
    $region18: #{tree_forward.1} parent=1 // pred_check
      _
    $region19: #{tree_forward.1} parent=1 // pred_check_branch
      %40 = sbr.rel (0) target = $region21
    $region20: #{tree_forward.1} parent=1 // pred_region
      %41 = dma.done [#allocation6], 512
    $region21: #{tree_forward.1} parent=1 // pred_fallthru
      _
    %p42 = scmp.eq.s32.totalorder 0, 0
    // Predicated region
    $region22: #{tree_forward.1} parent=1 // pred_check
      %p43 = pneg %p42
    $region23: #{tree_forward.1} parent=1 // pred_check_branch
      %45 = sbr.rel (%p43) target = $region25
    $region24: #{tree_forward.1} parent=1 // pred_region
      %vm46 = vcmask 261120
      %47 = vst.msk [vmem:[#allocation2] sm:$0xff] %vm46, 0.0
      %48 = vst.msk [vmem:[#allocation2 + $0x8] sm:$0xff] %vm46, 0.0
    $region25: #{tree_forward.1} parent=1 // pred_fallthru
      _
    %v49 = vld [vmem:[#allocation2] sm:$0xff]
    %v50 = vld [vmem:[#allocation2 + $0x8] sm:$0xff]
    %v51 = vld [vmem:[#allocation3] sm:$0xff]
    %v52 = vld [vmem:[#allocation3 + $0x8] sm:$0xff]
    %v53 = vld [vmem:[#allocation5] sm:$0xff]
    %v54 = vld [vmem:[#allocation5 + $0x8] sm:$0xff]
    %v55 = vld [vmem:[#allocation5 + $0x10] sm:$0xff]
    %v56 = vld [vmem:[#allocation5 + $0x18] sm:$0xff]
    %vm57 = vcmask 261120
    %v59 = vsel %vm57, %v51, 0
    %v62 = vsel %vm57, %v52, 0
    %64 = vmatprep.subr.mxu0 0.0
    %65 = vmatpush1.msra.mxu0 %v53
    %66 = vmatprep.subr.mxu0 0.0
    %67 = vmatpush1.msra.mxu0 %v54
    %68 = vmatprep.subr.mxu0 0.0
    %69 = vmatpush1.msra.mxu0 %v55
    %70 = vmatprep.subr.mxu0 0.0
    %71 = vmatpush1.msra.mxu0 %v56
    %72 = vmatprep.subr.mxu0 0.0
    %73 = vmatpush1.msra.mxu0 0.0
    %74 = vmatprep.subr.mxu0 0.0
    %75 = vmatpush1.msra.mxu0 0.0
    %76 = vmatprep.subr.mxu0 0.0
    %77 = vmatpush1.msra.mxu0 0.0
    %78 = vmatprep.subr.mxu0 0.0
    %79 = vmatpush1.msra.mxu0 0.0
    %80 = vmatprep.subr.mxu0 0.0
    %81 = vmatpush1.msra.mxu0 0.0
    %82 = vmatprep.subr.mxu0 0.0
    %83 = vmatpush1.msra.mxu0 0.0
    %84 = vmatprep.subr.mxu0 0.0
    %85 = vmatpush1.msra.mxu0 0.0
    %86 = vmatprep.subr.mxu0 0.0
    %87 = vmatpush1.msra.mxu0 0.0
    %88 = vmatprep.subr.mxu0 0.0
    %89 = vmatpush1.msra.mxu0 0.0
    %90 = vmatprep.subr.mxu0 0.0
    %91 = vmatpush1.msra.mxu0 0.0
    %92 = vmatprep.subr.mxu0 0.0
    %93 = vmatpush1.msra.mxu0 0.0
    %94 = vmatprep.subr.mxu0 0.0
    %95 = vmatpush1.msra.mxu0 0.0
    %96 = vmatprep.subr.mxu0 0.0
    %97 = vmatpush1.msra.mxu0 0.0
    %98 = vmatprep.subr.mxu0 0.0
    %99 = vmatpush1.msra.mxu0 0.0
    %100 = vmatprep.subr.mxu0 0.0
    %101 = vmatpush1.msra.mxu0 0.0
    %102 = vmatprep.subr.mxu0 0.0
    %103 = vmatpush1.msra.mxu0 0.0
    %104 = vmatprep.subr.mxu0 0.0
    %105 = vmatpush1.msra.mxu0 0.0
    %106 = vmatprep.subr.mxu0 0.0
    %107 = vmatpush1.msra.mxu0 0.0
    %108 = vmatprep.subr.mxu0 0.0
    %109 = vmatpush1.msra.mxu0 0.0
    %110 = vmatprep.subr.mxu0 0.0
    %111 = vmatpush1.msra.mxu0 0.0
    %112 = vmatprep.subr.mxu0 0.0
    %113 = vmatpush1.msra.mxu0 0.0
    %114 = vmatprep.subr.mxu0 0.0
    %115 = vmatpush1.msra.mxu0 0.0
    %116 = vmatprep.subr.mxu0 0.0
    %117 = vmatpush1.msra.mxu0 0.0
    %118 = vmatprep.subr.mxu0 0.0
    %119 = vmatpush1.msra.mxu0 0.0
    %120 = vmatprep.subr.mxu0 0.0
    %121 = vmatpush1.msra.mxu0 0.0
    %122 = vmatprep.subr.mxu0 0.0
    %123 = vmatpush1.msra.mxu0 0.0
    %124 = vmatprep.subr.mxu0 0.0
    %125 = vmatpush1.msra.mxu0 0.0
    %126 = vmatprep.subr.mxu0 0.0
    %127 = vmatpush1.msra.mxu0 0.0
    %128 = vmatprep.mubr.f32.mxu0 0.0
    %129 = vmatmul.mubr.f32.gmra.mrb[0].mxu0 %v59
    %v130 = vpop.f32.mrb[0].mxu0
    %v131 = vadd.f32 0.0, %v130
    %v132 = vpop.f32.mrb[0].mxu0
    %133 = vmatprep.mubr.f32.mxu0 0.0
    %134 = vmatmul.mubr.f32.gmra.mrb[0].mxu0 %v62
    %v135 = vpop.f32.mrb[0].mxu0
    %v136 = vadd.f32 0.0, %v135
    %v137 = vpop.f32.mrb[0].mxu0
    %138 = vdwg.mxu0
    %v139 = vadd.f32 %v49, %v131
    %v140 = vadd.f32 %v50, %v136
    %141 = vst.msk [vmem:[#allocation2] sm:$0xff] %vm57, %v139
    %142 = vst.msk [vmem:[#allocation2 + $0x8] sm:$0xff] %vm57, %v140
    // Predicated region
    $region26: #{tree_forward.1} parent=1 // pred_check
      %p143 = pneg %p42
    $region27: #{tree_forward.1} parent=1 // pred_check_branch
      %145 = sbr.rel (%p143) target = $region29
    $region28: #{tree_forward.1} parent=1 // pred_region
      %v146 = vld [vmem:[#allocation2] sm:$0xff]
      %v147 = vld [vmem:[#allocation2 + $0x8] sm:$0xff]
      %v148 = vld [vmem:[%s2] sm:$0x1]
      %v150 = vlaneseq
      %v151 = vshrl.u32 %v150, 7
      %v152 = vsub.s32 0, %v151
      %v153 = vrot.slane %v148, %v152
      %v155 = vadd.f32 %v146, %v153
      %v156 = vadd.f32 %v147, %v153
      %v157 = vtanh.pop %v155
      %v158 = vtanh.pop %v156
      %159 = vst.msk [vmem:[%s3] sm:$0xff] %vm57, %v157
      %160 = vst.msk [vmem:[%s3 + $0x8] sm:$0xff] %vm57, %v158
    $region29: #{tree_forward.1} parent=1 // pred_fallthru
      _
    // Predicated region
    $region30: #{tree_forward.1} parent=1 // pred_check
      _
    $region31: #{tree_forward.1} parent=1 // pred_check_branch
      %162 = sbr.rel (0) target = $region33
    $region32: #{tree_forward.1} parent=1 // pred_region
      _
    $region33: #{tree_forward.1} parent=1 // pred_fallthru
      _
    // Predicated region
    $region34: #{tree_forward.1} parent=1 // pred_check
      _
    $region35: #{tree_forward.1} parent=1 // pred_check_branch
      %164 = sbr.rel (0) target = $region37
    $region36: #{tree_forward.1} parent=1 // pred_region
      _
    $region37: #{tree_forward.1} parent=1 // pred_fallthru
      _
    %165 = vsyncpa [#allocation4], 1
    %166 = vsyncpa [#allocation6], 1

</llo_original>
